<compile_context>
chip_gen: v6e
topology: v6e:2x2x1
jax: 0.10.0
libtpu: 0.0.40
codegen_flags: <defaults>
</compile_context>

<pallas_src>
import functools

import jax
import jax.numpy as jnp
from jax.experimental import pallas as pl
from jax.experimental.pallas import tpu as pltpu

# ---- module constants (the PyTorch file references these globals) ----------
INPUT_DIM = 32
IMAGE_HEIGHT = 16
IMAGE_WIDTH = 16
HIDDEN_DIMS = [64, 64]
DROPOUT_RATE = 0.2   # unused at inference
BATCH_SIZE = 8

_LEAKY_SLOPE = 0.01  # nn.LeakyReLU() default
_TILE_B = 128        # rows per grid step (MXU-friendly on v5e/v6e/v7x)
_LANE = 128


def _round_up(x, m):
    return ((x + m - 1) // m) * m


def _generator_mlp_kernel(num_hidden, x_ref, *refs):
    """Fused MLP kernel over one (TILE_B, in_dim) batch tile.

    refs = (w0, b0, w1, b1, ..., w_last, b_last, out_ref)
      w_l : bf16, (in_pad, out_pad)      -- zero-padded to lane multiples
      b_l : f32,  (TILE_B, out_pad)      -- pre-broadcast, plain VPU add
    Hidden layers: Linear -> LeakyReLU (dropout = identity in eval mode).
    Last layer:    Linear -> Sigmoid.
    """
    out_ref = refs[-1]
    param_refs = refs[:-1]

    h = x_ref[...].astype(jnp.float32)

    num_layers = num_hidden + 1
    for layer in range(num_layers):
        w = param_refs[2 * layer][...]          # bf16
        b = param_refs[2 * layer + 1][...]      # f32, already (TILE_B, out_pad)
        h = jnp.dot(h.astype(jnp.bfloat16), w,
                    preferred_element_type=jnp.float32)
        h = h + b
        if layer < num_hidden:
            # LeakyReLU: one vmul + vmax (cheaper than cmp+select).
            h = jnp.maximum(h, _LEAKY_SLOPE * h)
        else:
            # Sigmoid: exp on EUP, divide moved to EUP via approx reciprocal.
            h = pl.reciprocal(1.0 + jnp.exp(-h), approx=True)

    out_ref[...] = h.astype(out_ref.dtype)


def _prepare_padded_params(params, tile_b):
    """Zero-pad feature dims to multiples of 128, cast W to bf16,
    pre-broadcast biases to (tile_b, out_pad).  Padding is exact."""
    padded = []
    prev_pad_in = params[0][0].shape[0]   # input dim kept as-is (full-dim block)
    for (w, b) in params:
        in_dim, out_dim = w.shape
        pad_in = prev_pad_in
        pad_out = _round_up(out_dim, _LANE)
        w_p = jnp.zeros((pad_in, pad_out), jnp.float32)
        w_p = w_p.at[:in_dim, :out_dim].set(w)
        b_flat = jnp.zeros((pad_out,), jnp.float32).at[:out_dim].set(
            jnp.reshape(b, (-1,)))
        b_p = jnp.broadcast_to(b_flat[None, :], (tile_b, pad_out))
        padded.append((w_p.astype(jnp.bfloat16), jnp.asarray(b_p)))
        prev_pad_in = pad_out
    return padded


def generator_forward(input_noise, params, tile_b=_TILE_B):
    """params: list of (W, b) with W shaped (in_dim, out_dim), b shaped (1, out_dim)."""
    batch, in_dim = input_noise.shape
    out_dim = IMAGE_HEIGHT * IMAGE_WIDTH
    num_hidden = len(params) - 1

    padded_params = _prepare_padded_params(params, tile_b)
    pad_out = padded_params[-1][0].shape[1]

    # Pad the batch up to a whole number of tiles (padded rows are sliced off).
    padded_batch = _round_up(batch, tile_b)
    if padded_batch != batch:
        x = jnp.zeros((padded_batch, in_dim), input_noise.dtype)
        x = x.at[:batch].set(input_noise)
    else:
        x = input_noise
    num_tiles = padded_batch // tile_b

    flat_args = [x]
    in_specs = [pl.BlockSpec((tile_b, in_dim), lambda i: (i, 0))]
    for (w, b) in padded_params:
        flat_args.append(w)
        in_specs.append(pl.BlockSpec(w.shape, lambda i: (0, 0)))   # VMEM-resident
        flat_args.append(b)
        in_specs.append(pl.BlockSpec(b.shape, lambda i: (0, 0)))   # VMEM-resident

    kernel = functools.partial(_generator_mlp_kernel, num_hidden)

    flat_out = pl.pallas_call(
        kernel,
        out_shape=jax.ShapeDtypeStruct((padded_batch, pad_out), jnp.float32),
        grid_spec=pltpu.PrefetchScalarGridSpec(
            num_scalar_prefetch=0,
            grid=(num_tiles,),
            in_specs=in_specs,
            out_specs=pl.BlockSpec((tile_b, pad_out), lambda i: (i, 0)),
        ),
        compiler_params=pltpu.CompilerParams(
            dimension_semantics=("parallel",),
        ),
    )(*flat_args)

    # Drop batch/feature padding, then torch.reshape(result, (-1, H, W)).
    flat_out = flat_out[:batch, :out_dim]
    return flat_out.reshape(-1, IMAGE_HEIGHT, IMAGE_WIDTH)


def init_params(key, hidden_dims):
    """Deterministic synthetic parameter init (shapes match nn.Linear layers)."""
    dims = [INPUT_DIM] + list(hidden_dims) + [IMAGE_HEIGHT * IMAGE_WIDTH]
    params = []
    for i in range(len(dims) - 1):
        key, kw, kb = jax.random.split(key, 3)
        fan_in = dims[i]
        bound = 1.0 / jnp.sqrt(fan_in)
        # Stored pre-transposed: (in_dim, out_dim).
        w = jax.random.uniform(kw, (dims[i], dims[i + 1]), jnp.float32, -bound, bound)
        b = jax.random.uniform(kb, (1, dims[i + 1]), jnp.float32, -bound, bound)
        params.append((w, b))
    return params


if __name__ == "__main__":
    key = jax.random.PRNGKey(0)
    key, knoise = jax.random.split(key)

    params = init_params(key, HIDDEN_DIMS)
    input_noise = jax.random.normal(knoise, (BATCH_SIZE, INPUT_DIM), jnp.float32)

    out = generator_forward(input_noise, params)
    out = jax.block_until_ready(out)

    # Sanity: shape and (approximate) sigmoid range.
    assert out.shape == (BATCH_SIZE, IMAGE_HEIGHT, IMAGE_WIDTH), out.shape
    assert bool(jnp.all((out >= -1e-3) & (out <= 1.0 + 1e-3)))

    # Cross-check against a pure-JAX f32 reference (kernel uses bf16 matmul
    # inputs, so allow a small absolute tolerance).
    def ref_forward(x, params):
        h = x
        for i, (w, b) in enumerate(params):
            h = h @ w + b
            if i < len(params) - 1:
                h = jnp.where(h >= 0, h, _LEAKY_SLOPE * h)
            else:
                h = jax.nn.sigmoid(h)
        return h.reshape(-1, IMAGE_HEIGHT, IMAGE_WIDTH)

    ref = ref_forward(input_noise, params)
    assert bool(jnp.allclose(out, ref, atol=2e-2, rtol=0.0)), (
        float(jnp.max(jnp.abs(out - ref))))

    print("KERNEL_OK")
</pallas_src>

<mosaic_0001>
module attributes {stable_mosaic.version = 11 : i64} {
  func.func @_generator_mlp_kernel(%arg0: i32, %arg1: memref<128x32xf32, #tpu.memory_space<vmem>>, %arg2: memref<32x128xbf16, #tpu.memory_space<vmem>>, %arg3: memref<128x128xf32, #tpu.memory_space<vmem>>, %arg4: memref<128x128xbf16, #tpu.memory_space<vmem>>, %arg5: memref<128x128xf32, #tpu.memory_space<vmem>>, %arg6: memref<128x256xbf16, #tpu.memory_space<vmem>>, %arg7: memref<128x256xf32, #tpu.memory_space<vmem>>, %arg8: memref<128x256xf32, #tpu.memory_space<vmem>>) attributes {dimension_semantics = [#tpu.dimension_semantics<parallel>], iteration_bounds = array<i64: 1>, scalar_prefetch = 0 : i64, scratch_operands = 0 : i64, tpu.core_type = #tpu.core_type<tc>, window_params = [{transform_indices = @transform_0, window_bounds = array<i64: 128, 32>}, {pipeline_mode = #tpu.pipeline_mode<synchronous>, transform_indices = @transform_1, window_bounds = array<i64: 32, 128>}, {pipeline_mode = #tpu.pipeline_mode<synchronous>, transform_indices = @transform_2, window_bounds = array<i64: 128, 128>}, {pipeline_mode = #tpu.pipeline_mode<synchronous>, transform_indices = @transform_3, window_bounds = array<i64: 128, 128>}, {pipeline_mode = #tpu.pipeline_mode<synchronous>, transform_indices = @transform_4, window_bounds = array<i64: 128, 128>}, {pipeline_mode = #tpu.pipeline_mode<synchronous>, transform_indices = @transform_5, window_bounds = array<i64: 128, 256>}, {pipeline_mode = #tpu.pipeline_mode<synchronous>, transform_indices = @transform_6, window_bounds = array<i64: 128, 256>}, {transform_indices = @transform_7, window_bounds = array<i64: 128, 256>}]} {
    %c0 = arith.constant 0 : index
    %c0_0 = arith.constant 0 : index
    %0 = vector.load %arg1[%c0, %c0_0] : memref<128x32xf32, #tpu.memory_space<vmem>>, vector<128x32xf32>
    %c0_1 = arith.constant 0 : index
    %c0_2 = arith.constant 0 : index
    %1 = vector.load %arg2[%c0_1, %c0_2] : memref<32x128xbf16, #tpu.memory_space<vmem>>, vector<32x128xbf16>
    %c0_3 = arith.constant 0 : index
    %c0_4 = arith.constant 0 : index
    %2 = vector.load %arg3[%c0_3, %c0_4] : memref<128x128xf32, #tpu.memory_space<vmem>>, vector<128x128xf32>
    %3 = arith.truncf %0 : vector<128x32xf32> to vector<128x32xbf16>
    %cst = arith.constant dense<0.000000e+00> : vector<128x128xf32>
    %4 = tpu.matmul %3, %1, %cst {dimension_numbers = #tpu.dot_dimension_numbers<[1], [0], [0], [1], [0, 0, 1, 1], [], []>} : vector<128x32xbf16>, vector<32x128xbf16>, vector<128x128xf32> -> vector<128x128xf32>
    %5 = arith.addf %4, %2 : vector<128x128xf32>
    %cst_5 = arith.constant 0.00999999977 : f32
    %6 = vector.broadcast %cst_5 : f32 to vector<128x128xf32>
    %7 = arith.mulf %6, %5 : vector<128x128xf32>
    %8 = arith.maximumf %5, %7 : vector<128x128xf32>
    %c0_6 = arith.constant 0 : index
    %c0_7 = arith.constant 0 : index
    %9 = vector.load %arg4[%c0_6, %c0_7] : memref<128x128xbf16, #tpu.memory_space<vmem>>, vector<128x128xbf16>
    %c0_8 = arith.constant 0 : index
    %c0_9 = arith.constant 0 : index
    %10 = vector.load %arg5[%c0_8, %c0_9] : memref<128x128xf32, #tpu.memory_space<vmem>>, vector<128x128xf32>
    %11 = arith.truncf %8 : vector<128x128xf32> to vector<128x128xbf16>
    %cst_10 = arith.constant dense<0.000000e+00> : vector<128x128xf32>
    %12 = tpu.matmul %11, %9, %cst_10 {dimension_numbers = #tpu.dot_dimension_numbers<[1], [0], [0], [1], [0, 0, 1, 1], [], []>} : vector<128x128xbf16>, vector<128x128xbf16>, vector<128x128xf32> -> vector<128x128xf32>
    %13 = arith.addf %12, %10 : vector<128x128xf32>
    %cst_11 = arith.constant 0.00999999977 : f32
    %14 = vector.broadcast %cst_11 : f32 to vector<128x128xf32>
    %15 = arith.mulf %14, %13 : vector<128x128xf32>
    %16 = arith.maximumf %13, %15 : vector<128x128xf32>
    %c0_12 = arith.constant 0 : index
    %c0_13 = arith.constant 0 : index
    %17 = vector.load %arg6[%c0_12, %c0_13] : memref<128x256xbf16, #tpu.memory_space<vmem>>, vector<128x256xbf16>
    %c0_14 = arith.constant 0 : index
    %c0_15 = arith.constant 0 : index
    %18 = vector.load %arg7[%c0_14, %c0_15] : memref<128x256xf32, #tpu.memory_space<vmem>>, vector<128x256xf32>
    %19 = arith.truncf %16 : vector<128x128xf32> to vector<128x128xbf16>
    %cst_16 = arith.constant dense<0.000000e+00> : vector<128x256xf32>
    %20 = tpu.matmul %19, %17, %cst_16 {dimension_numbers = #tpu.dot_dimension_numbers<[1], [0], [0], [1], [0, 0, 1, 1], [], []>} : vector<128x128xbf16>, vector<128x256xbf16>, vector<128x256xf32> -> vector<128x256xf32>
    %21 = arith.addf %20, %18 : vector<128x256xf32>
    %cst_17 = arith.constant 0.000000e+00 : f32
    %22 = vector.broadcast %cst_17 : f32 to vector<128x256xf32>
    %23 = arith.subf %22, %21 : vector<128x256xf32>
    %24 = math.exp %23 : vector<128x256xf32>
    %cst_18 = arith.constant 1.000000e+00 : f32
    %25 = vector.broadcast %cst_18 : f32 to vector<128x256xf32>
    %26 = arith.addf %25, %24 : vector<128x256xf32>
    %27 = tpu.reciprocal %26 {approx = true} : vector<128x256xf32> -> vector<128x256xf32>
    %c0_19 = arith.constant 0 : index
    %c0_20 = arith.constant 0 : index
    %28 = vector.load %arg8[%c0_19, %c0_20] : memref<128x256xf32, #tpu.memory_space<vmem>>, vector<128x256xf32>
    tpu.vector_store %arg8[%c0_19, %c0_20], %27 {strides = array<i32>} : memref<128x256xf32, #tpu.memory_space<vmem>>, vector<128x256xf32>,
    return
  }
  func.func @transform_0(%arg0: i32) -> (i32, i32) {
    %c0_i32 = arith.constant 0 : i32
    %c0_i32_0 = arith.constant 0 : i32
    return %arg0, %c0_i32 : i32, i32
  }
  func.func @transform_1(%arg0: i32) -> (i32, i32) {
    %c0_i32 = arith.constant 0 : i32
    %c0_i32_0 = arith.constant 0 : i32
    %c0_i32_1 = arith.constant 0 : i32
    return %c0_i32, %c0_i32_0 : i32, i32
  }
  func.func @transform_2(%arg0: i32) -> (i32, i32) {
    %c0_i32 = arith.constant 0 : i32
    %c0_i32_0 = arith.constant 0 : i32
    %c0_i32_1 = arith.constant 0 : i32
    return %c0_i32, %c0_i32_0 : i32, i32
  }
  func.func @transform_3(%arg0: i32) -> (i32, i32) {
    %c0_i32 = arith.constant 0 : i32
    %c0_i32_0 = arith.constant 0 : i32
    %c0_i32_1 = arith.constant 0 : i32
    return %c0_i32, %c0_i32_0 : i32, i32
  }
  func.func @transform_4(%arg0: i32) -> (i32, i32) {
    %c0_i32 = arith.constant 0 : i32
    %c0_i32_0 = arith.constant 0 : i32
    %c0_i32_1 = arith.constant 0 : i32
    return %c0_i32, %c0_i32_0 : i32, i32
  }
  func.func @transform_5(%arg0: i32) -> (i32, i32) {
    %c0_i32 = arith.constant 0 : i32
    %c0_i32_0 = arith.constant 0 : i32
    %c0_i32_1 = arith.constant 0 : i32
    return %c0_i32, %c0_i32_0 : i32, i32
  }
  func.func @transform_6(%arg0: i32) -> (i32, i32) {
    %c0_i32 = arith.constant 0 : i32
    %c0_i32_0 = arith.constant 0 : i32
    %c0_i32_1 = arith.constant 0 : i32
    return %c0_i32, %c0_i32_0 : i32, i32
  }
  func.func @transform_7(%arg0: i32) -> (i32, i32) {
    %c0_i32 = arith.constant 0 : i32
    %c0_i32_0 = arith.constant 0 : i32
    return %arg0, %c0_i32 : i32, i32
  }
}

</mosaic_0001>

<llo_original>
// kernel: tpu_custom_call.1
$region0: #{tpu_custom_call.1}
  #allocation0 [shape = 'u32[]', space=smem, size = 0x4, offset = 0x4, fixed_abs, tag = 'smem constant byte address 0x4 - core index']
  #allocation1 [shape = 'u32[144,128]{1,0:T(1,128)}', space=vmem, size = 0x12000, scoped, tag = 'internal scratch']
  %s0 = inlined_call_operand.vmem [shape: f32[128,32], index: 0, kind: input, shape index: {}]
  %s1 = inlined_call_operand.vmem [shape: bf16[32,128], index: 1, kind: input, shape index: {}]
  %s2 = inlined_call_operand.vmem [shape: f32[128,128], index: 2, kind: input, shape index: {}]
  %s3 = inlined_call_operand.hbm [shape: bf16[128,128], index: 3, kind: input, shape index: {}]
  %s4 = inlined_call_operand.hbm [shape: f32[128,128], index: 4, kind: input, shape index: {}]
  %s5 = inlined_call_operand.hbm [shape: bf16[128,256], index: 5, kind: input, shape index: {}]
  %s6 = inlined_call_operand.hbm [shape: f32[128,256], index: 6, kind: input, shape index: {}]
  %s7 = inlined_call_operand.hbm [shape: f32[128,256], index: 7, kind: output, shape index: {}]
  %s8 = sld [smem:[#allocation0]]
  $region54: #{tpu_custom_call.1} parent=0
    _
  %s10 = ssub.s32 1, %s8
  %s11 = scalar_select 0, %s10, %s8
  $region1: #{tpu_custom_call.1} parent=0
    #allocation2 [shape = 'u8[32768]{0}', space=vmem, size = 0x8000, scoped, tag = 'input window, operand 3, single buffered']
    #allocation3 [shape = 's32[1]{0}', space=sflag, size = 0x4, scoped, tag = 'scoped memory for tpu_custom_call.1']
    #allocation4 [shape = 's32[1]{0}', space=sflag, size = 0x4, scoped, tag = 'scoped memory for tpu_custom_call.1']
    #allocation5 [shape = 'u8[65536]{0}', space=vmem, size = 0x10000, scoped, tag = 'input window, operand 4, single buffered']
    #allocation6 [shape = 's32[1]{0}', space=sflag, size = 0x4, scoped, tag = 'scoped memory for tpu_custom_call.1']
    #allocation7 [shape = 'u8[65536]{0}', space=vmem, size = 0x10000, scoped, tag = 'input window, operand 5, single buffered']
    #allocation8 [shape = 'u8[131072]{0}', space=vmem, size = 0x20000, scoped, tag = 'input window, operand 6, single buffered']
    #allocation9 [shape = 's32[1]{0}', space=sflag, size = 0x4, scoped, tag = 'scoped memory for tpu_custom_call.1']
    #allocation10 [shape = 'u8[131072]{0}', space=vmem, size = 0x20000, scoped, tag = 'output window, operand 0, single buffered']
    %12 = vsyncpa [#allocation3], 0
    %13 = vsyncpa [#allocation6], 0
    %14 = vsyncpa [#allocation9], 0
    %15 = vsyncpa [#allocation4], 0
    // Predicated region
    $region2: #{tpu_custom_call.1} parent=1 // pred_check
      _
    $region3: #{tpu_custom_call.1} parent=1 // pred_check_branch
      %17 = sbr.rel (0) target = $region5
    $region4: #{tpu_custom_call.1} parent=1 // pred_region
      _
    $region5: #{tpu_custom_call.1} parent=1 // pred_fallthru
      _
    // Predicated region
    $region6: #{tpu_custom_call.1} parent=1 // pred_check
      _
    $region7: #{tpu_custom_call.1} parent=1 // pred_check_branch
      %19 = sbr.rel (0) target = $region9
    $region8: #{tpu_custom_call.1} parent=1 // pred_region
      _
    $region9: #{tpu_custom_call.1} parent=1 // pred_fallthru
      _
    // Predicated region
    $region10: #{tpu_custom_call.1} parent=1 // pred_check
      _
    $region11: #{tpu_custom_call.1} parent=1 // pred_check_branch
      %21 = sbr.rel (0) target = $region13
    $region12: #{tpu_custom_call.1} parent=1 // pred_region
      _
    $region13: #{tpu_custom_call.1} parent=1 // pred_fallthru
      _
    // Predicated region
    $region14: #{tpu_custom_call.1} parent=1 // pred_check
      _
    $region15: #{tpu_custom_call.1} parent=1 // pred_check_branch
      %23 = sbr.rel (0) target = $region17
    $region16: #{tpu_custom_call.1} parent=1 // pred_region
      %s25 = ssub.s32 1024, 1024
      %26 = vsyncadd [#allocation3], %s25
      %s27 = sshll.u32 [#allocation2], 4
      %s28 = int_to_ptr.vmem [resolvable:$true] %s27
      %33 = dma.hbm_to_vmem [thread:$0]  %s3, 1024, %s28, [#allocation3], 64, 64, 4
    $region17: #{tpu_custom_call.1} parent=1 // pred_fallthru
      _
    // Predicated region
    $region18: #{tpu_custom_call.1} parent=1 // pred_check
      _
    $region19: #{tpu_custom_call.1} parent=1 // pred_check_branch
      %35 = sbr.rel (0) target = $region21
    $region20: #{tpu_custom_call.1} parent=1 // pred_region
      %s37 = ssub.s32 2048, 2048
      %38 = vsyncadd [#allocation6], %s37
      %s39 = sshll.u32 [#allocation5], 4
      %s40 = int_to_ptr.vmem [resolvable:$true] %s39
      %45 = dma.hbm_to_vmem [thread:$0]  %s4, 2048, %s40, [#allocation6], 128, 128, 8
    $region21: #{tpu_custom_call.1} parent=1 // pred_fallthru
      _
    // Predicated region
    $region22: #{tpu_custom_call.1} parent=1 // pred_check
      _
    $region23: #{tpu_custom_call.1} parent=1 // pred_check_branch
      %47 = sbr.rel (0) target = $region25
    $region24: #{tpu_custom_call.1} parent=1 // pred_region
      %s49 = ssub.s32 2048, 2048
      %50 = vsyncadd [#allocation6], %s49
      %s51 = sshll.u32 [#allocation7], 4
      %s52 = int_to_ptr.vmem [resolvable:$true] %s51
      %57 = dma.hbm_to_vmem [thread:$0]  %s5, 2048, %s52, [#allocation6], 128, 128, 8
    $region25: #{tpu_custom_call.1} parent=1 // pred_fallthru
      _
    // Predicated region
    $region26: #{tpu_custom_call.1} parent=1 // pred_check
      _
    $region27: #{tpu_custom_call.1} parent=1 // pred_check_branch
      %59 = sbr.rel (0) target = $region29
    $region28: #{tpu_custom_call.1} parent=1 // pred_region
      %s61 = ssub.s32 4096, 4096
      %62 = vsyncadd [#allocation9], %s61
      %s63 = sshll.u32 [#allocation8], 4
      %s64 = int_to_ptr.vmem [resolvable:$true] %s63
      %69 = dma.hbm_to_vmem [thread:$0]  %s6, 4096, %s64, [#allocation9], 256, 256, 16
    $region29: #{tpu_custom_call.1} parent=1 // pred_fallthru
      _
    // Predicated region
    $region30: #{tpu_custom_call.1} parent=1 // pred_check
      _
    $region31: #{tpu_custom_call.1} parent=1 // pred_check_branch
      %71 = sbr.rel (0) target = $region33
    $region32: #{tpu_custom_call.1} parent=1 // pred_region
      %72 = dma.done [#allocation3], 1024
    $region33: #{tpu_custom_call.1} parent=1 // pred_fallthru
      _
    // Predicated region
    $region34: #{tpu_custom_call.1} parent=1 // pred_check
      _
    $region35: #{tpu_custom_call.1} parent=1 // pred_check_branch
      %74 = sbr.rel (0) target = $region37
    $region36: #{tpu_custom_call.1} parent=1 // pred_region
      %75 = dma.done [#allocation6], 2048
    $region37: #{tpu_custom_call.1} parent=1 // pred_fallthru
      _
    // Predicated region
    $region38: #{tpu_custom_call.1} parent=1 // pred_check
      _
    $region39: #{tpu_custom_call.1} parent=1 // pred_check_branch
      %77 = sbr.rel (0) target = $region41
    $region40: #{tpu_custom_call.1} parent=1 // pred_region
      %78 = dma.done [#allocation6], 2048
    $region41: #{tpu_custom_call.1} parent=1 // pred_fallthru
      _
    // Predicated region
    $region42: #{tpu_custom_call.1} parent=1 // pred_check
      _
    $region43: #{tpu_custom_call.1} parent=1 // pred_check_branch
      %80 = sbr.rel (0) target = $region45
    $region44: #{tpu_custom_call.1} parent=1 // pred_region
      %81 = dma.done [#allocation9], 4096
    $region45: #{tpu_custom_call.1} parent=1 // pred_fallthru
      _
    %v83 = vld [vmem:[%s0] sm:$0xff]
    %v84 = vld [vmem:[%s0 + $0x8] sm:$0xff]
    %v85 = vld [vmem:[%s0 + $0x10] sm:$0xff]
    %v86 = vld [vmem:[%s0 + $0x18] sm:$0xff]
    %v87 = vld [vmem:[%s0 + $0x20] sm:$0xff]
    %v88 = vld [vmem:[%s0 + $0x28] sm:$0xff]
    %v89 = vld [vmem:[%s0 + $0x30] sm:$0xff]
    %v90 = vld [vmem:[%s0 + $0x38] sm:$0xff]
    %v91 = vld [vmem:[%s0 + $0x40] sm:$0xff]
    %v92 = vld [vmem:[%s0 + $0x48] sm:$0xff]
    %v93 = vld [vmem:[%s0 + $0x50] sm:$0xff]
    %v94 = vld [vmem:[%s0 + $0x58] sm:$0xff]
    %v95 = vld [vmem:[%s0 + $0x60] sm:$0xff]
    %v96 = vld [vmem:[%s0 + $0x68] sm:$0xff]
    %v97 = vld [vmem:[%s0 + $0x70] sm:$0xff]
    %v98 = vld [vmem:[%s0 + $0x78] sm:$0xff]
    %v99 = vld [vmem:[%s1] sm:$0xf]
    %v100 = vld [vmem:[%s1 + $0x4] sm:$0xf]
    %v101 = vld [vmem:[%s1 + $0x8] sm:$0xf]
    %v102 = vld [vmem:[%s1 + $0xc] sm:$0xf]
    %v103 = vld [vmem:[%s2] sm:$0xff]
    %v104 = vld [vmem:[%s2 + $0x8] sm:$0xff]
    %v105 = vld [vmem:[%s2 + $0x10] sm:$0xff]
    %v106 = vld [vmem:[%s2 + $0x18] sm:$0xff]
    %v107 = vld [vmem:[%s2 + $0x20] sm:$0xff]
    %v108 = vld [vmem:[%s2 + $0x28] sm:$0xff]
    %v109 = vld [vmem:[%s2 + $0x30] sm:$0xff]
    %v110 = vld [vmem:[%s2 + $0x38] sm:$0xff]
    %v111 = vld [vmem:[%s2 + $0x40] sm:$0xff]
    %v112 = vld [vmem:[%s2 + $0x48] sm:$0xff]
    %v113 = vld [vmem:[%s2 + $0x50] sm:$0xff]
    %v114 = vld [vmem:[%s2 + $0x58] sm:$0xff]
    %v115 = vld [vmem:[%s2 + $0x60] sm:$0xff]
    %v116 = vld [vmem:[%s2 + $0x68] sm:$0xff]
    %v117 = vld [vmem:[%s2 + $0x70] sm:$0xff]
    %v118 = vld [vmem:[%s2 + $0x78] sm:$0xff]
    %v119 = vpack.c.bf16 %v84, %v83
    %v120 = vpack.c.bf16 %v86, %v85
    %v121 = vpack.c.bf16 %v88, %v87
    %v122 = vpack.c.bf16 %v90, %v89
    %v123 = vpack.c.bf16 %v92, %v91
    %v124 = vpack.c.bf16 %v94, %v93
    %v125 = vpack.c.bf16 %v96, %v95
    %v126 = vpack.c.bf16 %v98, %v97
    %v131 = vunpack.c.l.b16 %v99
    %v132 = vunpack.c.l.b16 %v100
    %v133 = vunpack.c.l.b16 %v101
    %v134 = vunpack.c.l.b16 %v102
    %v135 = vpack.c.b16 %v132, %v131
    %v136 = vpack.c.b16 %v134, %v133
    %vm139 = vcmask 261120
    %v141 = vsel %vm139, %v119, 0
    %v144 = vsel %vm139, %v120, 0
    %v147 = vsel %vm139, %v121, 0
    %v150 = vsel %vm139, %v122, 0
    %v153 = vsel %vm139, %v123, 0
    %v156 = vsel %vm139, %v124, 0
    %v159 = vsel %vm139, %v125, 0
    %v162 = vsel %vm139, %v126, 0
    %164 = vmatprep.subr.bf16.mxu0 0
    %165 = vmatpush1.bf16.msra.mxu0 0
    %166 = vmatprep.subr.bf16.mxu0 0
    %167 = vmatpush1.bf16.msra.mxu0 0
    %168 = vmatprep.subr.bf16.mxu0 0
    %169 = vmatpush1.bf16.msra.mxu0 0
    %170 = vmatprep.subr.bf16.mxu0 0
    %171 = vmatpush1.bf16.msra.mxu0 0
    %172 = vmatprep.subr.bf16.mxu0 0
    %173 = vmatpush1.bf16.msra.mxu0 0
    %174 = vmatprep.subr.bf16.mxu0 0
    %175 = vmatpush1.bf16.msra.mxu0 0
    %176 = vmatprep.subr.bf16.mxu0 0
    %177 = vmatpush1.bf16.msra.mxu0 %v136
    %178 = vmatprep.subr.bf16.mxu0 0
    %179 = vmatpush1.bf16.msra.mxu0 %v135
    %180 = vmatprep.subr.bf16.mxu0 0
    %181 = vmatpush2.bf16.msra.mxu0 0
    %182 = vmatprep.subr.bf16.mxu0 0
    %183 = vmatpush2.bf16.msra.mxu0 0
    %184 = vmatprep.subr.bf16.mxu0 0
    %185 = vmatpush2.bf16.msra.mxu0 0
    %186 = vmatprep.subr.bf16.mxu0 0
    %187 = vmatpush2.bf16.msra.mxu0 0
    %188 = vmatprep.subr.bf16.mxu0 0
    %189 = vmatpush2.bf16.msra.mxu0 0
    %190 = vmatprep.subr.bf16.mxu0 0
    %191 = vmatpush2.bf16.msra.mxu0 0
    %192 = vmatprep.subr.bf16.mxu0 0
    %193 = vmatpush2.bf16.msra.mxu0 0
    %194 = vmatprep.subr.bf16.mxu0 0
    %195 = vmatpush2.bf16.msra.mxu0 0
    %196 = vmatprep.mubr.bf16.mxu0 0
    %197 = vmatmul.mubr.bf16.gmra.mxu0 %v141
    %v198 = vpop.f32.mrf.mxu0
    %v199 = vadd.f32 %v103, %v198
    %v200 = vpop.f32.mrf.mxu0
    %v201 = vpop.f32.mrf.mxu0
    %v202 = vadd.f32 %v104, %v201
    %v203 = vpop.f32.mrf.mxu0
    %204 = vmatprep.mubr.bf16.mxu0 0
    %205 = vmatmul.mubr.bf16.gmra.mxu0 %v144
    %v206 = vpop.f32.mrf.mxu0
    %v207 = vadd.f32 %v105, %v206
    %v208 = vpop.f32.mrf.mxu0
    %v209 = vpop.f32.mrf.mxu0
    %v210 = vadd.f32 %v106, %v209
    %v211 = vpop.f32.mrf.mxu0
    %212 = vmatprep.mubr.bf16.mxu0 0
    %213 = vmatmul.mubr.bf16.gmra.mxu0 %v147
    %v214 = vpop.f32.mrf.mxu0
    %v215 = vadd.f32 %v107, %v214
    %v216 = vpop.f32.mrf.mxu0
    %v217 = vpop.f32.mrf.mxu0
    %v218 = vadd.f32 %v108, %v217
    %v219 = vpop.f32.mrf.mxu0
    %220 = vmatprep.mubr.bf16.mxu0 0
    %221 = vmatmul.mubr.bf16.gmra.mxu0 %v150
    %v222 = vpop.f32.mrf.mxu0
    %v223 = vadd.f32 %v109, %v222
    %v224 = vpop.f32.mrf.mxu0
    %v225 = vpop.f32.mrf.mxu0
    %v226 = vadd.f32 %v110, %v225
    %v227 = vpop.f32.mrf.mxu0
    %228 = vmatprep.mubr.bf16.mxu0 0
    %229 = vmatmul.mubr.bf16.gmra.mxu0 %v153
    %v230 = vpop.f32.mrf.mxu0
    %v231 = vadd.f32 %v111, %v230
    %v232 = vpop.f32.mrf.mxu0
    %v233 = vpop.f32.mrf.mxu0
    %v234 = vadd.f32 %v112, %v233
    %v235 = vpop.f32.mrf.mxu0
    %236 = vmatprep.mubr.bf16.mxu0 0
    %237 = vmatmul.mubr.bf16.gmra.mxu0 %v156
    %v238 = vpop.f32.mrf.mxu0
    %v239 = vadd.f32 %v113, %v238
    %v240 = vpop.f32.mrf.mxu0
    %v241 = vpop.f32.mrf.mxu0
    %v242 = vadd.f32 %v114, %v241
    %v243 = vpop.f32.mrf.mxu0
    %244 = vmatprep.mubr.bf16.mxu0 0
    %245 = vmatmul.mubr.bf16.gmra.mxu0 %v159
    %v246 = vpop.f32.mrf.mxu0
    %v247 = vadd.f32 %v115, %v246
    %v248 = vpop.f32.mrf.mxu0
    %v249 = vpop.f32.mrf.mxu0
    %v250 = vadd.f32 %v116, %v249
    %v251 = vpop.f32.mrf.mxu0
    %252 = vmatprep.mubr.bf16.mxu0 0
    %253 = vmatmul.mubr.bf16.gmra.mxu0 %v162
    %v254 = vpop.f32.mrf.mxu0
    %v255 = vadd.f32 %v117, %v254
    %v256 = vpop.f32.mrf.mxu0
    %v257 = vpop.f32.mrf.mxu0
    %v258 = vadd.f32 %v118, %v257
    %v259 = vpop.f32.mrf.mxu0
    %260 = vdwg.mxu0
    %v261 = vmul.f32 %v199, 0.01
    %v262 = vmul.f32 %v202, 0.01
    %v263 = vmul.f32 %v207, 0.01
    %v264 = vmul.f32 %v210, 0.01
    %v265 = vmul.f32 %v215, 0.01
    %v266 = vmul.f32 %v218, 0.01
    %v267 = vmul.f32 %v223, 0.01
    %v268 = vmul.f32 %v226, 0.01
    %v269 = vmul.f32 %v231, 0.01
    %v270 = vmul.f32 %v234, 0.01
    %v271 = vmul.f32 %v239, 0.01
    %v272 = vmul.f32 %v242, 0.01
    %v273 = vmul.f32 %v247, 0.01
    %v274 = vmul.f32 %v250, 0.01
    %v275 = vmul.f32 %v255, 0.01
    %v276 = vmul.f32 %v258, 0.01
    %v277 = vmax.f32 %v199, %v261
    %v278 = vmax.f32 %v202, %v262
    %v279 = vmax.f32 %v207, %v263
    %v280 = vmax.f32 %v210, %v264
    %v281 = vmax.f32 %v215, %v265
    %v282 = vmax.f32 %v218, %v266
    %v283 = vmax.f32 %v223, %v267
    %v284 = vmax.f32 %v226, %v268
    %v285 = vmax.f32 %v231, %v269
    %v286 = vmax.f32 %v234, %v270
    %v287 = vmax.f32 %v239, %v271
    %v288 = vmax.f32 %v242, %v272
    %v289 = vmax.f32 %v247, %v273
    %v290 = vmax.f32 %v250, %v274
    %v291 = vmax.f32 %v255, %v275
    %v292 = vmax.f32 %v258, %v276
    %v293 = vld [vmem:[#allocation2] sm:$0xf]
    %v294 = vld [vmem:[#allocation2 + $0x4] sm:$0xf]
    %v295 = vld [vmem:[#allocation2 + $0x8] sm:$0xf]
    %v296 = vld [vmem:[#allocation2 + $0xc] sm:$0xf]
    %v297 = vld [vmem:[#allocation2 + $0x10] sm:$0xf]
    %v298 = vld [vmem:[#allocation2 + $0x14] sm:$0xf]
    %v299 = vld [vmem:[#allocation2 + $0x18] sm:$0xf]
    %v300 = vld [vmem:[#allocation2 + $0x1c] sm:$0xf]
    %v301 = vld [vmem:[#allocation2 + $0x20] sm:$0xf]
    %v302 = vld [vmem:[#allocation2 + $0x24] sm:$0xf]
    %v303 = vld [vmem:[#allocation2 + $0x28] sm:$0xf]
    %v304 = vld [vmem:[#allocation2 + $0x2c] sm:$0xf]
    %v305 = vld [vmem:[#allocation2 + $0x30] sm:$0xf]
    %v306 = vld [vmem:[#allocation2 + $0x34] sm:$0xf]
    %v307 = vld [vmem:[#allocation2 + $0x38] sm:$0xf]
    %v308 = vld [vmem:[#allocation2 + $0x3c] sm:$0xf]
    %v309 = vld [vmem:[#allocation5] sm:$0xff]
    %v310 = vld [vmem:[#allocation5 + $0x8] sm:$0xff]
    %v311 = vld [vmem:[#allocation5 + $0x10] sm:$0xff]
    %v312 = vld [vmem:[#allocation5 + $0x18] sm:$0xff]
    %v313 = vld [vmem:[#allocation5 + $0x20] sm:$0xff]
    %v314 = vld [vmem:[#allocation5 + $0x28] sm:$0xff]
    %v315 = vld [vmem:[#allocation5 + $0x30] sm:$0xff]
    %v316 = vld [vmem:[#allocation5 + $0x38] sm:$0xff]
    %v317 = vld [vmem:[#allocation5 + $0x40] sm:$0xff]
    %v318 = vld [vmem:[#allocation5 + $0x48] sm:$0xff]
    %v319 = vld [vmem:[#allocation5 + $0x50] sm:$0xff]
    %v320 = vld [vmem:[#allocation5 + $0x58] sm:$0xff]
    %v321 = vld [vmem:[#allocation5 + $0x60] sm:$0xff]
    %v322 = vld [vmem:[#allocation5 + $0x68] sm:$0xff]
    %v323 = vld [vmem:[#allocation5 + $0x70] sm:$0xff]
    %v324 = vld [vmem:[#allocation5 + $0x78] sm:$0xff]
    %v325 = vpack.c.bf16 %v278, %v277
    %v326 = vpack.c.bf16 %v280, %v279
    %v327 = vpack.c.bf16 %v282, %v281
    %v328 = vpack.c.bf16 %v284, %v283
    %v329 = vpack.c.bf16 %v286, %v285
    %v330 = vpack.c.bf16 %v288, %v287
    %v331 = vpack.c.bf16 %v290, %v289
    %v332 = vpack.c.bf16 %v292, %v291
    %v349 = vunpack.c.l.b16 %v293
    %v350 = vunpack.c.l.b16 %v294
    %v351 = vunpack.c.l.b16 %v295
    %v352 = vunpack.c.l.b16 %v296
    %v353 = vunpack.c.l.b16 %v297
    %v354 = vunpack.c.l.b16 %v298
    %v355 = vunpack.c.l.b16 %v299
    %v356 = vunpack.c.l.b16 %v300
    %v357 = vunpack.c.l.b16 %v301
    %v358 = vunpack.c.l.b16 %v302
    %v359 = vunpack.c.l.b16 %v303
    %v360 = vunpack.c.l.b16 %v304
    %v361 = vunpack.c.l.b16 %v305
    %v362 = vunpack.c.l.b16 %v306
    %v363 = vunpack.c.l.b16 %v307
    %v364 = vunpack.c.l.b16 %v308
    %v365 = vpack.c.b16 %v350, %v349
    %v366 = vpack.c.b16 %v352, %v351
    %v367 = vpack.c.b16 %v354, %v353
    %v368 = vpack.c.b16 %v356, %v355
    %v369 = vpack.c.b16 %v358, %v357
    %v370 = vpack.c.b16 %v360, %v359
    %v371 = vpack.c.b16 %v362, %v361
    %v372 = vpack.c.b16 %v364, %v363
    %381 = vmatprep.subr.bf16.mxu0 0
    %382 = vmatpush1.bf16.msra.mxu0 %v372
    %383 = vmatprep.subr.bf16.mxu0 0
    %384 = vmatpush1.bf16.msra.mxu0 %v371
    %385 = vmatprep.subr.bf16.mxu0 0
    %386 = vmatpush1.bf16.msra.mxu0 %v370
    %387 = vmatprep.subr.bf16.mxu0 0
    %388 = vmatpush1.bf16.msra.mxu0 %v369
    %389 = vmatprep.subr.bf16.mxu0 0
    %390 = vmatpush1.bf16.msra.mxu0 %v368
    %391 = vmatprep.subr.bf16.mxu0 0
    %392 = vmatpush1.bf16.msra.mxu0 %v367
    %393 = vmatprep.subr.bf16.mxu0 0
    %394 = vmatpush1.bf16.msra.mxu0 %v366
    %395 = vmatprep.subr.bf16.mxu0 0
    %396 = vmatpush1.bf16.msra.mxu0 %v365
    %397 = vmatprep.subr.bf16.mxu0 0
    %398 = vmatpush2.bf16.msra.mxu0 0
    %399 = vmatprep.subr.bf16.mxu0 0
    %400 = vmatpush2.bf16.msra.mxu0 0
    %401 = vmatprep.subr.bf16.mxu0 0
    %402 = vmatpush2.bf16.msra.mxu0 0
    %403 = vmatprep.subr.bf16.mxu0 0
    %404 = vmatpush2.bf16.msra.mxu0 0
    %405 = vmatprep.subr.bf16.mxu0 0
    %406 = vmatpush2.bf16.msra.mxu0 0
    %407 = vmatprep.subr.bf16.mxu0 0
    %408 = vmatpush2.bf16.msra.mxu0 0
    %409 = vmatprep.subr.bf16.mxu0 0
    %410 = vmatpush2.bf16.msra.mxu0 0
    %411 = vmatprep.subr.bf16.mxu0 0
    %412 = vmatpush2.bf16.msra.mxu0 0
    %413 = vmatprep.mubr.bf16.mxu0 0
    %414 = vmatmul.mubr.bf16.gmra.mxu0 %v325
    %v415 = vpop.f32.mrf.mxu0
    %v416 = vadd.f32 %v309, %v415
    %v417 = vpop.f32.mrf.mxu0
    %v418 = vpop.f32.mrf.mxu0
    %v419 = vadd.f32 %v310, %v418
    %v420 = vpop.f32.mrf.mxu0
    %421 = vmatprep.mubr.bf16.mxu0 0
    %422 = vmatmul.mubr.bf16.gmra.mxu0 %v326
    %v423 = vpop.f32.mrf.mxu0
    %v424 = vadd.f32 %v311, %v423
    %v425 = vpop.f32.mrf.mxu0
    %v426 = vpop.f32.mrf.mxu0
    %v427 = vadd.f32 %v312, %v426
    %v428 = vpop.f32.mrf.mxu0
    %429 = vmatprep.mubr.bf16.mxu0 0
    %430 = vmatmul.mubr.bf16.gmra.mxu0 %v327
    %v431 = vpop.f32.mrf.mxu0
    %v432 = vadd.f32 %v313, %v431
    %v433 = vpop.f32.mrf.mxu0
    %v434 = vpop.f32.mrf.mxu0
    %v435 = vadd.f32 %v314, %v434
    %v436 = vpop.f32.mrf.mxu0
    %437 = vmatprep.mubr.bf16.mxu0 0
    %438 = vmatmul.mubr.bf16.gmra.mxu0 %v328
    %v439 = vpop.f32.mrf.mxu0
    %v440 = vadd.f32 %v315, %v439
    %v441 = vpop.f32.mrf.mxu0
    %v442 = vpop.f32.mrf.mxu0
    %v443 = vadd.f32 %v316, %v442
    %v444 = vpop.f32.mrf.mxu0
    %445 = vmatprep.mubr.bf16.mxu0 0
    %446 = vmatmul.mubr.bf16.gmra.mxu0 %v329
    %v447 = vpop.f32.mrf.mxu0
    %v448 = vadd.f32 %v317, %v447
    %v449 = vpop.f32.mrf.mxu0
    %v450 = vpop.f32.mrf.mxu0
    %v451 = vadd.f32 %v318, %v450
    %v452 = vpop.f32.mrf.mxu0
    %453 = vmatprep.mubr.bf16.mxu0 0
    %454 = vmatmul.mubr.bf16.gmra.mxu0 %v330
    %v455 = vpop.f32.mrf.mxu0
    %v456 = vadd.f32 %v319, %v455
    %v457 = vpop.f32.mrf.mxu0
    %v458 = vpop.f32.mrf.mxu0
    %v459 = vadd.f32 %v320, %v458
    %v460 = vpop.f32.mrf.mxu0
    %461 = vmatprep.mubr.bf16.mxu0 0
    %462 = vmatmul.mubr.bf16.gmra.mxu0 %v331
    %v463 = vpop.f32.mrf.mxu0
    %v464 = vadd.f32 %v321, %v463
    %v465 = vpop.f32.mrf.mxu0
    %v466 = vpop.f32.mrf.mxu0
    %v467 = vadd.f32 %v322, %v466
    %v468 = vpop.f32.mrf.mxu0
    %469 = vmatprep.mubr.bf16.mxu0 0
    %470 = vmatmul.mubr.bf16.gmra.mxu0 %v332
    %v471 = vpop.f32.mrf.mxu0
    %v472 = vadd.f32 %v323, %v471
    %v473 = vpop.f32.mrf.mxu0
    %v474 = vpop.f32.mrf.mxu0
    %v475 = vadd.f32 %v324, %v474
    %v476 = vpop.f32.mrf.mxu0
    %477 = vdwg.mxu0
    %v478 = vmul.f32 %v416, 0.01
    %v479 = vmul.f32 %v419, 0.01
    %v480 = vmul.f32 %v424, 0.01
    %v481 = vmul.f32 %v427, 0.01
    %v482 = vmul.f32 %v432, 0.01
    %v483 = vmul.f32 %v435, 0.01
    %v484 = vmul.f32 %v440, 0.01
    %v485 = vmul.f32 %v443, 0.01
    %v486 = vmul.f32 %v448, 0.01
    %v487 = vmul.f32 %v451, 0.01
    %v488 = vmul.f32 %v456, 0.01
    %v489 = vmul.f32 %v459, 0.01
    %v490 = vmul.f32 %v464, 0.01
    %v491 = vmul.f32 %v467, 0.01
    %v492 = vmul.f32 %v472, 0.01
    %v493 = vmul.f32 %v475, 0.01
    %v494 = vmax.f32 %v416, %v478
    %v495 = vmax.f32 %v419, %v479
    %v496 = vmax.f32 %v424, %v480
    %v497 = vmax.f32 %v427, %v481
    %v498 = vmax.f32 %v432, %v482
    %v499 = vmax.f32 %v435, %v483
    %v500 = vmax.f32 %v440, %v484
    %v501 = vmax.f32 %v443, %v485
    %v502 = vmax.f32 %v448, %v486
    %v503 = vmax.f32 %v451, %v487
    %v504 = vmax.f32 %v456, %v488
    %v505 = vmax.f32 %v459, %v489
    %v506 = vmax.f32 %v464, %v490
    %v507 = vmax.f32 %v467, %v491
    %v508 = vmax.f32 %v472, %v492
    %v509 = vmax.f32 %v475, %v493
    %v510 = vld [vmem:[#allocation7] sm:$0xff]
    %v511 = vld [vmem:[#allocation7 + $0x8] sm:$0xff]
    %v512 = vld [vmem:[#allocation7 + $0x10] sm:$0xff]
    %v513 = vld [vmem:[#allocation7 + $0x18] sm:$0xff]
    %v514 = vld [vmem:[#allocation7 + $0x20] sm:$0xff]
    %v515 = vld [vmem:[#allocation7 + $0x28] sm:$0xff]
    %v516 = vld [vmem:[#allocation7 + $0x30] sm:$0xff]
    %v517 = vld [vmem:[#allocation7 + $0x38] sm:$0xff]
    %v518 = vld [vmem:[#allocation7 + $0x40] sm:$0xff]
    %v519 = vld [vmem:[#allocation7 + $0x48] sm:$0xff]
    %v520 = vld [vmem:[#allocation7 + $0x50] sm:$0xff]
    %v521 = vld [vmem:[#allocation7 + $0x58] sm:$0xff]
    %v522 = vld [vmem:[#allocation7 + $0x60] sm:$0xff]
    %v523 = vld [vmem:[#allocation7 + $0x68] sm:$0xff]
    %v524 = vld [vmem:[#allocation7 + $0x70] sm:$0xff]
    %v525 = vld [vmem:[#allocation7 + $0x78] sm:$0xff]
    %v526 = vld [vmem:[#allocation8] sm:$0xff]
    %v527 = vld [vmem:[#allocation8 + $0x8] sm:$0xff]
    %v528 = vld [vmem:[#allocation8 + $0x10] sm:$0xff]
    %v529 = vld [vmem:[#allocation8 + $0x18] sm:$0xff]
    %v530 = vld [vmem:[#allocation8 + $0x20] sm:$0xff]
    %v531 = vld [vmem:[#allocation8 + $0x28] sm:$0xff]
    %v532 = vld [vmem:[#allocation8 + $0x30] sm:$0xff]
    %v533 = vld [vmem:[#allocation8 + $0x38] sm:$0xff]
    %v534 = vld [vmem:[#allocation8 + $0x40] sm:$0xff]
    %v535 = vld [vmem:[#allocation8 + $0x48] sm:$0xff]
    %v536 = vld [vmem:[#allocation8 + $0x50] sm:$0xff]
    %v537 = vld [vmem:[#allocation8 + $0x58] sm:$0xff]
    %v538 = vld [vmem:[#allocation8 + $0x60] sm:$0xff]
    %v539 = vld [vmem:[#allocation8 + $0x68] sm:$0xff]
    %v540 = vld [vmem:[#allocation8 + $0x70] sm:$0xff]
    %v541 = vld [vmem:[#allocation8 + $0x78] sm:$0xff]
    %v542 = vld [vmem:[#allocation8 + $0x80] sm:$0xff]
    %v543 = vld [vmem:[#allocation8 + $0x88] sm:$0xff]
    %v544 = vld [vmem:[#allocation8 + $0x90] sm:$0xff]
    %v545 = vld [vmem:[#allocation8 + $0x98] sm:$0xff]
    %v546 = vld [vmem:[#allocation8 + $0xa0] sm:$0xff]
    %v547 = vld [vmem:[#allocation8 + $0xa8] sm:$0xff]
    %v548 = vld [vmem:[#allocation8 + $0xb0] sm:$0xff]
    %v549 = vld [vmem:[#allocation8 + $0xb8] sm:$0xff]
    %v550 = vld [vmem:[#allocation8 + $0xc0] sm:$0xff]
    %v551 = vld [vmem:[#allocation8 + $0xc8] sm:$0xff]
    %v552 = vld [vmem:[#allocation8 + $0xd0] sm:$0xff]
    %v553 = vld [vmem:[#allocation8 + $0xd8] sm:$0xff]
    %v554 = vld [vmem:[#allocation8 + $0xe0] sm:$0xff]
    %v555 = vld [vmem:[#allocation8 + $0xe8] sm:$0xff]
    %v556 = vld [vmem:[#allocation8 + $0xf0] sm:$0xff]
    %v557 = vld [vmem:[#allocation8 + $0xf8] sm:$0xff]
    %v558 = vpack.c.bf16 %v495, %v494
    %v559 = vpack.c.bf16 %v497, %v496
    %v560 = vpack.c.bf16 %v499, %v498
    %v561 = vpack.c.bf16 %v501, %v500
    %v562 = vpack.c.bf16 %v503, %v502
    %v563 = vpack.c.bf16 %v505, %v504
    %v564 = vpack.c.bf16 %v507, %v506
    %v565 = vpack.c.bf16 %v509, %v508
    %v582 = vunpack.c.l.b16 %v510
    %v583 = vunpack.c.h.b16 %v510
    %v584 = vunpack.c.l.b16 %v511
    %v585 = vunpack.c.h.b16 %v511
    %v586 = vunpack.c.l.b16 %v512
    %v587 = vunpack.c.h.b16 %v512
    %v588 = vunpack.c.l.b16 %v513
    %v589 = vunpack.c.h.b16 %v513
    %v590 = vunpack.c.l.b16 %v514
    %v591 = vunpack.c.h.b16 %v514
    %v592 = vunpack.c.l.b16 %v515
    %v593 = vunpack.c.h.b16 %v515
    %v594 = vunpack.c.l.b16 %v516
    %v595 = vunpack.c.h.b16 %v516
    %v596 = vunpack.c.l.b16 %v517
    %v597 = vunpack.c.h.b16 %v517
    %v598 = vunpack.c.l.b16 %v518
    %v599 = vunpack.c.h.b16 %v518
    %v600 = vunpack.c.l.b16 %v519
    %v601 = vunpack.c.h.b16 %v519
    %v602 = vunpack.c.l.b16 %v520
    %v603 = vunpack.c.h.b16 %v520
    %v604 = vunpack.c.l.b16 %v521
    %v605 = vunpack.c.h.b16 %v521
    %v606 = vunpack.c.l.b16 %v522
    %v607 = vunpack.c.h.b16 %v522
    %v608 = vunpack.c.l.b16 %v523
    %v609 = vunpack.c.h.b16 %v523
    %v610 = vunpack.c.l.b16 %v524
    %v611 = vunpack.c.h.b16 %v524
    %v612 = vunpack.c.l.b16 %v525
    %v613 = vunpack.c.h.b16 %v525
    %v614 = vpack.c.b16 %v584, %v582
    %v615 = vpack.c.b16 %v585, %v583
    %v616 = vpack.c.b16 %v588, %v586
    %v617 = vpack.c.b16 %v589, %v587
    %v618 = vpack.c.b16 %v592, %v590
    %v619 = vpack.c.b16 %v593, %v591
    %v620 = vpack.c.b16 %v596, %v594
    %v621 = vpack.c.b16 %v597, %v595
    %v622 = vpack.c.b16 %v600, %v598
    %v623 = vpack.c.b16 %v601, %v599
    %v624 = vpack.c.b16 %v604, %v602
    %v625 = vpack.c.b16 %v605, %v603
    %v626 = vpack.c.b16 %v608, %v606
    %v627 = vpack.c.b16 %v609, %v607
    %v628 = vpack.c.b16 %v612, %v610
    %v629 = vpack.c.b16 %v613, %v611
    %646 = vmatprep.subr.bf16.mxu0 %v629
    %647 = vmatpush1.bf16.msra.mxu0 %v628
    %648 = vmatprep.subr.bf16.mxu0 %v627
    %649 = vmatpush1.bf16.msra.mxu0 %v626
    %650 = vmatprep.subr.bf16.mxu0 %v625
    %651 = vmatpush1.bf16.msra.mxu0 %v624
    %652 = vmatprep.subr.bf16.mxu0 %v623
    %653 = vmatpush1.bf16.msra.mxu0 %v622
    %654 = vmatprep.subr.bf16.mxu0 %v621
    %655 = vmatpush1.bf16.msra.mxu0 %v620
    %656 = vmatprep.subr.bf16.mxu0 %v619
    %657 = vmatpush1.bf16.msra.mxu0 %v618
    %658 = vmatprep.subr.bf16.mxu0 %v617
    %659 = vmatpush1.bf16.msra.mxu0 %v616
    %660 = vmatprep.subr.bf16.mxu0 %v615
    %661 = vmatpush1.bf16.msra.mxu0 %v614
    %662 = vmatprep.subr.bf16.mxu0 0
    %663 = vmatpush2.bf16.msra.mxu0 0
    %664 = vmatprep.subr.bf16.mxu0 0
    %665 = vmatpush2.bf16.msra.mxu0 0
    %666 = vmatprep.subr.bf16.mxu0 0
    %667 = vmatpush2.bf16.msra.mxu0 0
    %668 = vmatprep.subr.bf16.mxu0 0
    %669 = vmatpush2.bf16.msra.mxu0 0
    %670 = vmatprep.subr.bf16.mxu0 0
    %671 = vmatpush2.bf16.msra.mxu0 0
    %672 = vmatprep.subr.bf16.mxu0 0
    %673 = vmatpush2.bf16.msra.mxu0 0
    %674 = vmatprep.subr.bf16.mxu0 0
    %675 = vmatpush2.bf16.msra.mxu0 0
    %676 = vmatprep.subr.bf16.mxu0 0
    %677 = vmatpush2.bf16.msra.mxu0 0
    %678 = vmatprep.mubr.bf16.mxu0 0
    %679 = vmatmul.mubr.bf16.gmra.mxu0 %v558
    %v680 = vpop.f32.mrf.mxu0
    %v681 = vadd.f32 %v526, %v680
    %v682 = vpop.f32.mrf.mxu0
    %v683 = vadd.f32 %v527, %v682
    %v684 = vpop.f32.mrf.mxu0
    %v685 = vadd.f32 %v528, %v684
    %v686 = vpop.f32.mrf.mxu0
    %v687 = vadd.f32 %v529, %v686
    %688 = vmatprep.mubr.bf16.mxu0 0
    %689 = vmatmul.mubr.bf16.gmra.mxu0 %v559
    %v690 = vpop.f32.mrf.mxu0
    %v691 = vadd.f32 %v530, %v690
    %v692 = vpop.f32.mrf.mxu0
    %v693 = vadd.f32 %v531, %v692
    %v694 = vpop.f32.mrf.mxu0
    %v695 = vadd.f32 %v532, %v694
    %v696 = vpop.f32.mrf.mxu0
    %v697 = vadd.f32 %v533, %v696
    %698 = vmatprep.mubr.bf16.mxu0 0
    %699 = vmatmul.mubr.bf16.gmra.mxu0 %v560
    %v700 = vpop.f32.mrf.mxu0
    %v701 = vadd.f32 %v534, %v700
    %v702 = vpop.f32.mrf.mxu0
    %v703 = vadd.f32 %v535, %v702
    %v704 = vpop.f32.mrf.mxu0
    %v705 = vadd.f32 %v536, %v704
    %v706 = vpop.f32.mrf.mxu0
    %v707 = vadd.f32 %v537, %v706
    %708 = vmatprep.mubr.bf16.mxu0 0
    %709 = vmatmul.mubr.bf16.gmra.mxu0 %v561
    %v710 = vpop.f32.mrf.mxu0
    %v711 = vadd.f32 %v538, %v710
    %v712 = vpop.f32.mrf.mxu0
    %v713 = vadd.f32 %v539, %v712
    %v714 = vpop.f32.mrf.mxu0
    %v715 = vadd.f32 %v540, %v714
    %v716 = vpop.f32.mrf.mxu0
    %v717 = vadd.f32 %v541, %v716
    %718 = vmatprep.mubr.bf16.mxu0 0
    %719 = vmatmul.mubr.bf16.gmra.mxu0 %v562
    %v720 = vpop.f32.mrf.mxu0
    %v721 = vadd.f32 %v542, %v720
    %v722 = vpop.f32.mrf.mxu0
    %v723 = vadd.f32 %v543, %v722
    %v724 = vpop.f32.mrf.mxu0
    %v725 = vadd.f32 %v544, %v724
    %v726 = vpop.f32.mrf.mxu0
    %v727 = vadd.f32 %v545, %v726
    %728 = vmatprep.mubr.bf16.mxu0 0
    %729 = vmatmul.mubr.bf16.gmra.mxu0 %v563
    %v730 = vpop.f32.mrf.mxu0
    %v731 = vadd.f32 %v546, %v730
    %v732 = vpop.f32.mrf.mxu0
    %v733 = vadd.f32 %v547, %v732
    %v734 = vpop.f32.mrf.mxu0
    %v735 = vadd.f32 %v548, %v734
    %v736 = vpop.f32.mrf.mxu0
    %v737 = vadd.f32 %v549, %v736
    %738 = vmatprep.mubr.bf16.mxu0 0
    %739 = vmatmul.mubr.bf16.gmra.mxu0 %v564
    %v740 = vpop.f32.mrf.mxu0
    %v741 = vadd.f32 %v550, %v740
    %v742 = vpop.f32.mrf.mxu0
    %v743 = vadd.f32 %v551, %v742
    %v744 = vpop.f32.mrf.mxu0
    %v745 = vadd.f32 %v552, %v744
    %v746 = vpop.f32.mrf.mxu0
    %v747 = vadd.f32 %v553, %v746
    %748 = vmatprep.mubr.bf16.mxu0 0
    %749 = vmatmul.mubr.bf16.gmra.mxu0 %v565
    %v750 = vpop.f32.mrf.mxu0
    %v751 = vadd.f32 %v554, %v750
    %v752 = vpop.f32.mrf.mxu0
    %v753 = vadd.f32 %v555, %v752
    %v754 = vpop.f32.mrf.mxu0
    %v755 = vadd.f32 %v556, %v754
    %v756 = vpop.f32.mrf.mxu0
    %v757 = vadd.f32 %v557, %v756
    %758 = vdwg.mxu0
    %v759 = vsub.f32 0.0, %v681
    %v760 = vsub.f32 0.0, %v683
    %v761 = vsub.f32 0.0, %v685
    %v762 = vsub.f32 0.0, %v687
    %v763 = vsub.f32 0.0, %v691
    %v764 = vsub.f32 0.0, %v693
    %v765 = vsub.f32 0.0, %v695
    %v766 = vsub.f32 0.0, %v697
    %v767 = vsub.f32 0.0, %v701
    %v768 = vsub.f32 0.0, %v703
    %v769 = vsub.f32 0.0, %v705
    %v770 = vsub.f32 0.0, %v707
    %v771 = vsub.f32 0.0, %v711
    %v772 = vsub.f32 0.0, %v713
    %v773 = vsub.f32 0.0, %v715
    %v774 = vsub.f32 0.0, %v717
    %v775 = vsub.f32 0.0, %v721
    %v776 = vsub.f32 0.0, %v723
    %v777 = vsub.f32 0.0, %v725
    %v778 = vsub.f32 0.0, %v727
    %v779 = vsub.f32 0.0, %v731
    %v780 = vsub.f32 0.0, %v733
    %v781 = vsub.f32 0.0, %v735
    %v782 = vsub.f32 0.0, %v737
    %v783 = vsub.f32 0.0, %v741
    %v784 = vsub.f32 0.0, %v743
    %v785 = vsub.f32 0.0, %v745
    %v786 = vsub.f32 0.0, %v747
    %v787 = vsub.f32 0.0, %v751
    %v788 = vsub.f32 0.0, %v753
    %v789 = vsub.f32 0.0, %v755
    %v790 = vsub.f32 0.0, %v757
    %v791 = vmul.f32 %v759, 1.442695
    %v792 = vpow.pop %v791
    %v793 = vmul.f32 %v760, 1.442695
    %v794 = vpow.pop %v793
    %v795 = vmul.f32 %v761, 1.442695
    %v796 = vpow.pop %v795
    %v797 = vmul.f32 %v762, 1.442695
    %v798 = vpow.pop %v797
    %v799 = vmul.f32 %v763, 1.442695
    %v800 = vpow.pop %v799
    %v801 = vmul.f32 %v764, 1.442695
    %v802 = vpow.pop %v801
    %v803 = vmul.f32 %v765, 1.442695
    %v804 = vpow.pop %v803
    %v805 = vmul.f32 %v766, 1.442695
    %v806 = vpow.pop %v805
    %v807 = vmul.f32 %v767, 1.442695
    %v808 = vpow.pop %v807
    %v809 = vmul.f32 %v768, 1.442695
    %v810 = vpow.pop %v809
    %v811 = vmul.f32 %v769, 1.442695
    %v812 = vpow.pop %v811
    %v813 = vmul.f32 %v770, 1.442695
    %v814 = vpow.pop %v813
    %v815 = vmul.f32 %v771, 1.442695
    %v816 = vpow.pop %v815
    %v817 = vmul.f32 %v772, 1.442695
    %v818 = vpow.pop %v817
    %v819 = vmul.f32 %v773, 1.442695
    %v820 = vpow.pop %v819
    %v821 = vmul.f32 %v774, 1.442695
    %v822 = vpow.pop %v821
    %v823 = vmul.f32 %v775, 1.442695
    %v824 = vpow.pop %v823
    %v825 = vmul.f32 %v776, 1.442695
    %v826 = vpow.pop %v825
    %v827 = vmul.f32 %v777, 1.442695
    %v828 = vpow.pop %v827
    %v829 = vmul.f32 %v778, 1.442695
    %v830 = vpow.pop %v829
    %v831 = vmul.f32 %v779, 1.442695
    %v832 = vpow.pop %v831
    %v833 = vmul.f32 %v780, 1.442695
    %v834 = vpow.pop %v833
    %v835 = vmul.f32 %v781, 1.442695
    %v836 = vpow.pop %v835
    %v837 = vmul.f32 %v782, 1.442695
    %v838 = vpow.pop %v837
    %v839 = vmul.f32 %v783, 1.442695
    %v840 = vpow.pop %v839
    %v841 = vmul.f32 %v784, 1.442695
    %v842 = vpow.pop %v841
    %v843 = vmul.f32 %v785, 1.442695
    %v844 = vpow.pop %v843
    %v845 = vmul.f32 %v786, 1.442695
    %v846 = vpow.pop %v845
    %v847 = vmul.f32 %v787, 1.442695
    %v848 = vpow.pop %v847
    %v849 = vmul.f32 %v788, 1.442695
    %v850 = vpow.pop %v849
    %v851 = vmul.f32 %v789, 1.442695
    %v852 = vpow.pop %v851
    %v853 = vmul.f32 %v790, 1.442695
    %v854 = vpow.pop %v853
    %v855 = vadd.f32 %v792, 1.0
    %v856 = vadd.f32 %v794, 1.0
    %v857 = vadd.f32 %v796, 1.0
    %v858 = vadd.f32 %v798, 1.0
    %v859 = vadd.f32 %v800, 1.0
    %v860 = vadd.f32 %v802, 1.0
    %v861 = vadd.f32 %v804, 1.0
    %v862 = vadd.f32 %v806, 1.0
    %v863 = vadd.f32 %v808, 1.0
    %v864 = vadd.f32 %v810, 1.0
    %v865 = vadd.f32 %v812, 1.0
    %v866 = vadd.f32 %v814, 1.0
    %v867 = vadd.f32 %v816, 1.0
    %v868 = vadd.f32 %v818, 1.0
    %v869 = vadd.f32 %v820, 1.0
    %v870 = vadd.f32 %v822, 1.0
    %v871 = vadd.f32 %v824, 1.0
    %v872 = vadd.f32 %v826, 1.0
    %v873 = vadd.f32 %v828, 1.0
    %v874 = vadd.f32 %v830, 1.0
    %v875 = vadd.f32 %v832, 1.0
    %v876 = vadd.f32 %v834, 1.0
    %v877 = vadd.f32 %v836, 1.0
    %v878 = vadd.f32 %v838, 1.0
    %v879 = vadd.f32 %v840, 1.0
    %v880 = vadd.f32 %v842, 1.0
    %v881 = vadd.f32 %v844, 1.0
    %v882 = vadd.f32 %v846, 1.0
    %v883 = vadd.f32 %v848, 1.0
    %v884 = vadd.f32 %v850, 1.0
    %v885 = vadd.f32 %v852, 1.0
    %v886 = vadd.f32 %v854, 1.0
    %v887 = vrcp.pop %v855
    %v888 = vrcp.pop %v856
    %v889 = vrcp.pop %v857
    %v890 = vrcp.pop %v858
    %v891 = vrcp.pop %v859
    %v892 = vrcp.pop %v860
    %v893 = vrcp.pop %v861
    %v894 = vrcp.pop %v862
    %v895 = vrcp.pop %v863
    %v896 = vrcp.pop %v864
    %v897 = vrcp.pop %v865
    %v898 = vrcp.pop %v866
    %v899 = vrcp.pop %v867
    %v900 = vrcp.pop %v868
    %v901 = vrcp.pop %v869
    %v902 = vrcp.pop %v870
    %v903 = vrcp.pop %v871
    %v904 = vrcp.pop %v872
    %v905 = vrcp.pop %v873
    %v906 = vrcp.pop %v874
    %v907 = vrcp.pop %v875
    %v908 = vrcp.pop %v876
    %v909 = vrcp.pop %v877
    %v910 = vrcp.pop %v878
    %v911 = vrcp.pop %v879
    %v912 = vrcp.pop %v880
    %v913 = vrcp.pop %v881
    %v914 = vrcp.pop %v882
    %v915 = vrcp.pop %v883
    %v916 = vrcp.pop %v884
    %v917 = vrcp.pop %v885
    %v918 = vrcp.pop %v886
    %919 = vst [vmem:[#allocation10] sm:$0xff] %v887
    %920 = vst [vmem:[#allocation10 + $0x8] sm:$0xff] %v888
    %921 = vst [vmem:[#allocation10 + $0x10] sm:$0xff] %v889
    %922 = vst [vmem:[#allocation10 + $0x18] sm:$0xff] %v890
    %923 = vst [vmem:[#allocation10 + $0x20] sm:$0xff] %v891
    %924 = vst [vmem:[#allocation10 + $0x28] sm:$0xff] %v892
    %925 = vst [vmem:[#allocation10 + $0x30] sm:$0xff] %v893
    %926 = vst [vmem:[#allocation10 + $0x38] sm:$0xff] %v894
    %927 = vst [vmem:[#allocation10 + $0x40] sm:$0xff] %v895
    %928 = vst [vmem:[#allocation10 + $0x48] sm:$0xff] %v896
    %929 = vst [vmem:[#allocation10 + $0x50] sm:$0xff] %v897
    %930 = vst [vmem:[#allocation10 + $0x58] sm:$0xff] %v898
    %931 = vst [vmem:[#allocation10 + $0x60] sm:$0xff] %v899
    %932 = vst [vmem:[#allocation10 + $0x68] sm:$0xff] %v900
    %933 = vst [vmem:[#allocation10 + $0x70] sm:$0xff] %v901
    %934 = vst [vmem:[#allocation10 + $0x78] sm:$0xff] %v902
    %935 = vst [vmem:[#allocation10 + $0x80] sm:$0xff] %v903
    %936 = vst [vmem:[#allocation10 + $0x88] sm:$0xff] %v904
    %937 = vst [vmem:[#allocation10 + $0x90] sm:$0xff] %v905
    %938 = vst [vmem:[#allocation10 + $0x98] sm:$0xff] %v906
    %939 = vst [vmem:[#allocation10 + $0xa0] sm:$0xff] %v907
    %940 = vst [vmem:[#allocation10 + $0xa8] sm:$0xff] %v908
    %941 = vst [vmem:[#allocation10 + $0xb0] sm:$0xff] %v909
    %942 = vst [vmem:[#allocation10 + $0xb8] sm:$0xff] %v910
    %943 = vst [vmem:[#allocation10 + $0xc0] sm:$0xff] %v911
    %944 = vst [vmem:[#allocation10 + $0xc8] sm:$0xff] %v912
    %945 = vst [vmem:[#allocation10 + $0xd0] sm:$0xff] %v913
    %946 = vst [vmem:[#allocation10 + $0xd8] sm:$0xff] %v914
    %947 = vst [vmem:[#allocation10 + $0xe0] sm:$0xff] %v915
    %948 = vst [vmem:[#allocation10 + $0xe8] sm:$0xff] %v916
    %949 = vst [vmem:[#allocation10 + $0xf0] sm:$0xff] %v917
    %950 = vst [vmem:[#allocation10 + $0xf8] sm:$0xff] %v918
    // Predicated region
    $region46: #{tpu_custom_call.1} parent=1 // pred_check
      _
    $region47: #{tpu_custom_call.1} parent=1 // pred_check_branch
      %952 = sbr.rel (0) target = $region49
    $region48: #{tpu_custom_call.1} parent=1 // pred_region
      %s954 = ssub.s32 4096, 4096
      %955 = vsyncadd [#allocation4], %s954
      %s956 = sshll.u32 [#allocation10], 4
      %s957 = int_to_ptr.vmem [resolvable:$true] %s956
      %962 = dma.vmem_to_hbm [thread:$0]  %s957, 4096, %s7, [#allocation4], 256, 256, 16
    $region49: #{tpu_custom_call.1} parent=1 // pred_fallthru
      _
    // Predicated region
    $region50: #{tpu_custom_call.1} parent=1 // pred_check
      _
    $region51: #{tpu_custom_call.1} parent=1 // pred_check_branch
      %964 = sbr.rel (0) target = $region53
    $region52: #{tpu_custom_call.1} parent=1 // pred_region
      %965 = dma.done [#allocation4], 4096
    $region53: #{tpu_custom_call.1} parent=1 // pred_fallthru
      _
    %966 = vsyncpa [#allocation3], 1
    %967 = vsyncpa [#allocation6], 1
    %968 = vsyncpa [#allocation9], 1
    %969 = vsyncpa [#allocation4], 1

</llo_original>
